<compile_context>
chip_gen: v7x
topology: tpu7x:2x2x1
jax: 0.10.0
libtpu: 0.0.40
codegen_flags: <defaults>
</compile_context>

<pallas_src>
import functools

import jax
import jax.numpy as jnp
from jax.experimental import pallas as pl
from jax.experimental.pallas import tpu as pltpu


# Budget (bytes) for the in-kernel f32 upcast / diff / square temporaries of a
# single (row_chunk, D) slice. Keeps compiler scratch bounded on v7x (64 MiB).
_TEMP_VMEM_BUDGET = 4 * 1024 * 1024


def _vmem_capacity_bytes():
    """Physical per-core VMEM; falls back to a conservative 64 MiB (v7x)."""
    try:
        info = pltpu.get_tpu_info()
        cap = getattr(info, "vmem_capacity_bytes", None)
        if cap:
            return int(cap)
    except Exception:
        pass
    return 64 * 1024 * 1024


def _streaming_budgets():
    """(vmem_capacity, input VMEM budget, per-step streamed-bytes target)."""
    cap = _vmem_capacity_bytes()
    if cap >= 100 * 1024 * 1024:          # v5e / v6e class (128 MiB VMEM)
        input_budget = 48 * 1024 * 1024
    else:                                 # v7x class (64 MiB VMEM)
        input_budget = 24 * 1024 * 1024
    # Double-buffered, so one step may use at most half the input budget.
    step_bytes_target = min(16 * 1024 * 1024, input_budget // 2)
    return cap, input_budget, step_bytes_target


def _choose_batch_tile(B, D, pair_bytes, step_bytes_target):
    """Largest sublane-aligned batch tile hitting the per-step bytes target.

    Per-row cost = x1 + x2 row bytes + 512 B for the lane-padded (TB, 1) y
    block in VMEM (its HBM traffic is only 4 B/row, but VMEM space is padded).
    """
    per_row = D * pair_bytes + 128 * 4
    tb = (step_bytes_target // max(per_row, 1)) // 8 * 8
    tb = max(8, tb)
    if tb >= B:
        if B >= 16:
            # Guarantee >=2 tiles so the "parallel" axis spans both v7x TCs.
            tb = (((B + 1) // 2) + 7) // 8 * 8
        else:
            tb = B
    return min(tb, B)


def _choose_row_chunk(TB, D):
    """Rows per in-kernel chunk so ~3 f32 (rc, D) temporaries fit the budget."""
    rc = _TEMP_VMEM_BUDGET // (12 * max(D, 1))
    rc = max(8, (rc // 8) * 8)
    return min(rc, 512, TB)


def _contrastive_loss_kernel(x1_ref, x2_ref, y_ref, part_ref, *,
                             margin, batch, scale, row_chunk):
    i = pl.program_id(0)
    tb = x1_ref.shape[0]

    def chunk_loss(start, rc, masked):
        # Upcast only this (rc, D) slice -> bounded f32 temporaries.
        x1 = x1_ref[pl.ds(start, rc), :].astype(jnp.float32)
        x2 = x2_ref[pl.ds(start, rc), :].astype(jnp.float32)
        d = x1 - x2
        dist_sq = jnp.sum(d * d, axis=1, keepdims=True)          # (rc, 1)
        dist = jnp.sqrt(dist_sq)
        mdist = jnp.maximum(margin - dist, 0.0)                   # clamp(margin - dist, 0)
        yv = y_ref[pl.ds(start, rc), :]                           # (rc, 1) f32
        loss = yv * dist_sq + (1.0 - yv) * (mdist * mdist)        # (rc, 1)
        if masked:
            # Select (not multiply): padded OOB rows may hold NaN/Inf garbage.
            rows = i * tb + start + jax.lax.broadcasted_iota(jnp.int32, (rc, 1), 0)
            loss = jnp.where(rows < batch, loss, 0.0)
        return jnp.sum(loss)

    def tile_loss(masked):
        n_full = tb // row_chunk
        tail = tb - n_full * row_chunk
        if n_full == 1:
            acc = chunk_loss(0, row_chunk, masked)
        else:
            def body(c, acc):
                start = pl.multiple_of(c * row_chunk, row_chunk)
                return acc + chunk_loss(start, row_chunk, masked)
            acc = jax.lax.fori_loop(0, n_full, body, jnp.zeros((), jnp.float32))
        if tail > 0:
            acc = acc + chunk_loss(n_full * row_chunk, tail, masked)
        return acc

    def write(total):
        # Lane-dense (1, 8, 128) output block -> unmasked vst.
        part_ref[...] = jnp.full(part_ref.shape, total * scale, dtype=jnp.float32)

    if batch % tb == 0:
        # No ragged tail: the mask is compiled out entirely.
        write(tile_loss(masked=False))
    else:
        last = pl.num_programs(0) - 1

        @pl.when(i != last)
        def _():
            write(tile_loss(masked=False))

        @pl.when(i == last)
        def _():
            write(tile_loss(masked=True))


def contrastive_loss(input1, input2, y, margin=1.0, tile_rows=None):
    """Pallas TPU contrastive loss.

    input1, input2: (B, D) arrays (any float dtype; cast to f32 inside the kernel).
    y:              (B,) or (B, 1) labels (1 = similar pair, 0 = dissimilar).
    Returns a scalar float32 loss matching the PyTorch ContrastiveLoss.forward.
    """
    B, D = input1.shape
    y2d = jnp.reshape(y, (B, 1)).astype(jnp.float32)

    i1 = jnp.dtype(input1.dtype).itemsize
    i2 = jnp.dtype(input2.dtype).itemsize
    cap, _input_budget, step_bytes_target = _streaming_budgets()

    if tile_rows is None:
        TB = _choose_batch_tile(B, D, i1 + i2, step_bytes_target)
    else:
        TB = min(int(tile_rows), B)
        if TB < B:
            TB = max(8, (TB // 8) * 8)      # sublane-align user-supplied tiles
    RC = _choose_row_chunk(TB, D)

    num_tiles = pl.cdiv(B, TB)
    scale = 1.0 / (2.0 * float(B))

    kernel = functools.partial(
        _contrastive_loss_kernel,
        margin=float(margin), batch=B, scale=scale, row_chunk=RC)

    # Explicit VMEM limit: double-buffered inputs, lane-padded y blocks,
    # bounded f32 chunk temporaries, per-row vectors, and output blocks.
    vmem_needed = (
        2 * TB * D * (i1 + i2)     # double-buffered x1 / x2 input blocks
        + 2 * TB * 128 * 4         # double-buffered lane-padded (TB, 1) y blocks
        + 4 * RC * D * 4           # f32 upcast / diff / square chunk temporaries
        + 8 * RC * 128 * 4         # (RC, 1) per-row vectors (lane-padded if spilled)
        + 2 * 8 * 128 * 4          # double-buffered (1, 8, 128) partial outputs
    )
    vmem_limit = min(int(vmem_needed * 1.25) + (2 << 20), cap)

    partials = pl.pallas_call(
        kernel,
        out_shape=jax.ShapeDtypeStruct((num_tiles, 8, 128), jnp.float32),
        grid=(num_tiles,),
        in_specs=[
            pl.BlockSpec((TB, D), lambda i: (i, 0)),
            pl.BlockSpec((TB, D), lambda i: (i, 0)),
            pl.BlockSpec((TB, 1), lambda i: (i, 0)),
        ],
        out_specs=pl.BlockSpec((1, 8, 128), lambda i: (i, 0, 0)),
        compiler_params=pltpu.CompilerParams(
            dimension_semantics=("parallel",),
            vmem_limit_bytes=int(vmem_limit),
        ),
        cost_estimate=pl.CostEstimate(
            flops=3 * B * D + 8 * B,
            transcendentals=B,
            bytes_accessed=B * D * (i1 + i2) + B * 4 + num_tiles * 8 * 128 * 4,
        ),
    )(input1, input2, y2d)

    # Tiny final reduction over per-tile partials (already scaled by 1/(2B)).
    return jnp.sum(partials[:, 0, 0])


def _reference_loss(input1, input2, y, margin=1.0):
    # Pure-JAX reference mirroring the PyTorch forward.
    x1 = input1.astype(jnp.float32)
    x2 = input2.astype(jnp.float32)
    yf = y.astype(jnp.float32)
    diff = x1 - x2
    dist_sq = jnp.sum(diff ** 2, axis=1)
    dist = jnp.sqrt(dist_sq)
    mdist = jnp.maximum(margin - dist, 0.0)
    loss = yf * dist_sq + (1.0 - yf) * mdist ** 2
    return jnp.sum(loss) / 2.0 / x1.shape[0]


if __name__ == "__main__":
    key = jax.random.PRNGKey(0)
    k1, k2, k3 = jax.random.split(key, 3)

    # Small f32 case: whole batch in a single tile.
    B, D = 8, 32
    x1 = jax.random.normal(k1, (B, D), dtype=jnp.float32)
    x2 = jax.random.normal(k2, (B, D), dtype=jnp.float32)
    y = jax.random.bernoulli(k3, 0.5, (B,)).astype(jnp.float32)

    loss = jax.block_until_ready(contrastive_loss(x1, x2, y, margin=1.0))
    ref = _reference_loss(x1, x2, y, margin=1.0)
    assert jnp.allclose(loss, ref, rtol=1e-5, atol=1e-5), (loss, ref)

    # Multi-tile ragged tail (B % TB != 0): exercises the pl.when-gated mask.
    # tile_rows=10 also exercises rounding of user tiles down to a multiple of 8.
    B2, D2 = 20, 32
    k4, k5, k6 = jax.random.split(jax.random.PRNGKey(1), 3)
    x1b = jax.random.normal(k4, (B2, D2), dtype=jnp.float32)
    x2b = jax.random.normal(k5, (B2, D2), dtype=jnp.float32)
    yb = jax.random.bernoulli(k6, 0.5, (B2,)).astype(jnp.float32)
    loss_b = jax.block_until_ready(
        contrastive_loss(x1b, x2b, yb, margin=1.0, tile_rows=10))
    ref_b = _reference_loss(x1b, x2b, yb, margin=1.0)
    assert jnp.allclose(loss_b, ref_b, rtol=1e-5, atol=1e-5), (loss_b, ref_b)

    # Default tiling with B >= 16: auto-splits into >=2 tiles (v7x megacore path).
    B3, D3 = 32, 64
    k7, k8, k9 = jax.random.split(jax.random.PRNGKey(2), 3)
    x1c = jax.random.normal(k7, (B3, D3), dtype=jnp.float32)
    x2c = jax.random.normal(k8, (B3, D3), dtype=jnp.float32)
    yc = jax.random.bernoulli(k9, 0.5, (B3,)).astype(jnp.float32)
    loss_c = jax.block_until_ready(contrastive_loss(x1c, x2c, yc, margin=1.0))
    ref_c = _reference_loss(x1c, x2c, yc, margin=1.0)
    assert jnp.allclose(loss_c, ref_c, rtol=1e-5, atol=1e-5), (loss_c, ref_c)

    # bf16 inputs go straight into the kernel (no wrapper upcast; cast in VMEM).
    x1h = x1.astype(jnp.bfloat16)
    x2h = x2.astype(jnp.bfloat16)
    loss_h = jax.block_until_ready(contrastive_loss(x1h, x2h, y, margin=1.0))
    ref_h = _reference_loss(x1h, x2h, y, margin=1.0)
    assert jnp.allclose(loss_h, ref_h, rtol=1e-2, atol=1e-2), (loss_h, ref_h)

    print("KERNEL_OK")
</pallas_src>

<mosaic_0001>
module attributes {stable_mosaic.version = 11 : i64} {
  func.func @_contrastive_loss_kernel(%arg0: i32, %arg1: memref<8x32xf32, #tpu.memory_space<vmem>>, %arg2: memref<8x32xf32, #tpu.memory_space<vmem>>, %arg3: memref<8x1xf32, #tpu.memory_space<vmem>>, %arg4: memref<1x8x128xf32, #tpu.memory_space<vmem>>) attributes {dimension_semantics = [#tpu.dimension_semantics<parallel>], iteration_bounds = array<i64: 1>, scalar_prefetch = 0 : i64, scratch_operands = 0 : i64, tpu.core_type = #tpu.core_type<tc>, window_params = [{transform_indices = @transform_0, window_bounds = array<i64: 8, 32>}, {transform_indices = @transform_1, window_bounds = array<i64: 8, 32>}, {transform_indices = @transform_2, window_bounds = array<i64: 8, 1>}, {transform_indices = @transform_3, window_bounds = array<i64: 1, 8, 128>}]} {
    %c0 = arith.constant 0 : index
    %c0_0 = arith.constant 0 : index
    %0 = vector.load %arg1[%c0, %c0_0] : memref<8x32xf32, #tpu.memory_space<vmem>>, vector<8x32xf32>
    %c0_1 = arith.constant 0 : index
    %c0_2 = arith.constant 0 : index
    %1 = vector.load %arg2[%c0_1, %c0_2] : memref<8x32xf32, #tpu.memory_space<vmem>>, vector<8x32xf32>
    %2 = arith.subf %0, %1 : vector<8x32xf32>
    %3 = arith.mulf %2, %2 : vector<8x32xf32>
    %cst = arith.constant dense<0.000000e+00> : vector<8xf32>
    %4 = vector.multi_reduction <add>, %3, %cst [1] : vector<8x32xf32> to vector<8xf32>
    %5 = vector.shape_cast %4 : vector<8xf32> to vector<8x1xf32>
    %6 = math.sqrt %5 : vector<8x1xf32>
    %cst_3 = arith.constant 1.000000e+00 : f32
    %7 = vector.broadcast %cst_3 : f32 to vector<8x1xf32>
    %8 = arith.subf %7, %6 : vector<8x1xf32>
    %cst_4 = arith.constant 0.000000e+00 : f32
    %9 = vector.broadcast %cst_4 : f32 to vector<8x1xf32>
    %10 = arith.maximumf %8, %9 : vector<8x1xf32>
    %c0_5 = arith.constant 0 : index
    %c0_6 = arith.constant 0 : index
    %11 = vector.load %arg3[%c0_5, %c0_6] : memref<8x1xf32, #tpu.memory_space<vmem>>, vector<8x1xf32>
    %12 = arith.mulf %11, %5 : vector<8x1xf32>
    %cst_7 = arith.constant 1.000000e+00 : f32
    %13 = vector.broadcast %cst_7 : f32 to vector<8x1xf32>
    %14 = arith.subf %13, %11 : vector<8x1xf32>
    %15 = arith.mulf %10, %10 : vector<8x1xf32>
    %16 = arith.mulf %14, %15 : vector<8x1xf32>
    %17 = arith.addf %12, %16 : vector<8x1xf32>
    %18 = vector.shape_cast %17 : vector<8x1xf32> to vector<1x8x1xf32>
    %cst_8 = arith.constant dense<0.000000e+00> : vector<1xf32>
    %19 = vector.multi_reduction <add>, %18, %cst_8 [1, 2] : vector<1x8x1xf32> to vector<1xf32>
    %20 = vector.shape_cast %19 : vector<1xf32> to vector<1x1x1xf32>
    %21 = vector.extract %20[0, 0, 0] : f32 from vector<1x1x1xf32>
    %cst_9 = arith.constant 6.250000e-02 : f32
    %22 = arith.mulf %21, %cst_9 : f32
    %23 = vector.broadcast %22 : f32 to vector<1x8x128xf32>
    %c0_10 = arith.constant 0 : index
    %c0_11 = arith.constant 0 : index
    %c0_12 = arith.constant 0 : index
    %24 = vector.load %arg4[%c0_10, %c0_11, %c0_12] : memref<1x8x128xf32, #tpu.memory_space<vmem>>, vector<1x8x128xf32>
    tpu.vector_store %arg4[%c0_10, %c0_11, %c0_12], %23 {strides = array<i32>} : memref<1x8x128xf32, #tpu.memory_space<vmem>>, vector<1x8x128xf32>,
    return
  }
  func.func @transform_0(%arg0: i32) -> (i32, i32) {
    %c0_i32 = arith.constant 0 : i32
    %c0_i32_0 = arith.constant 0 : i32
    return %arg0, %c0_i32 : i32, i32
  }
  func.func @transform_1(%arg0: i32) -> (i32, i32) {
    %c0_i32 = arith.constant 0 : i32
    %c0_i32_0 = arith.constant 0 : i32
    return %arg0, %c0_i32 : i32, i32
  }
  func.func @transform_2(%arg0: i32) -> (i32, i32) {
    %c0_i32 = arith.constant 0 : i32
    %c0_i32_0 = arith.constant 0 : i32
    return %arg0, %c0_i32 : i32, i32
  }
  func.func @transform_3(%arg0: i32) -> (i32, i32, i32) {
    %c0_i32 = arith.constant 0 : i32
    %c0_i32_0 = arith.constant 0 : i32
    %c0_i32_1 = arith.constant 0 : i32
    return %arg0, %c0_i32, %c0_i32_0 : i32, i32, i32
  }
}

</mosaic_0001>

<llo_original>
// kernel: tpu_custom_call.1
$region0: #{tpu_custom_call.1}
  #allocation0 [shape = 'u32[]', space=smem, size = 0x4, offset = 0x4, fixed_abs, tag = 'smem constant byte address 0x4 - core index']
  #allocation1 [shape = 'u32[144,128]{1,0:T(1,128)}', space=vmem, size = 0x12000, scoped, tag = 'internal scratch']
  %s0 = inlined_call_operand.vmem [shape: f32[8,32], index: 0, kind: input, shape index: {}]
  %s1 = inlined_call_operand.hbm [shape: f32[8,32], index: 1, kind: input, shape index: {}]
  %s2 = inlined_call_operand.vmem [shape: f32[8,1], index: 2, kind: input, shape index: {}]
  %s3 = inlined_call_operand.hbm [shape: f32[1,8,128], index: 3, kind: output, shape index: {}]
  %s4 = sld [smem:[#allocation0]]
  $region26: #{tpu_custom_call.1} parent=0
    _
  %s6 = ssub.s32 1, %s4
  %s7 = scalar_select 0, %s6, %s4
  $region1: #{tpu_custom_call.1} parent=0
    #allocation2 [shape = 'u8[4096]{0}', space=vmem, size = 0x1000, scoped, tag = 'input window, operand 1, single buffered']
    #allocation3 [shape = 's32[1]{0}', space=sflag, size = 0x4, scoped, tag = 'scoped memory for tpu_custom_call.1']
    #allocation4 [shape = 's32[1]{0}', space=sflag, size = 0x4, scoped, tag = 'scoped memory for tpu_custom_call.1']
    #allocation5 [shape = 'u8[4096]{0}', space=vmem, size = 0x1000, scoped, tag = 'output window, operand 0, single buffered']
    %8 = vsyncpa [#allocation3], 0
    %9 = vsyncpa [#allocation4], 0
    // Predicated region
    $region2: #{tpu_custom_call.1} parent=1 // pred_check
      _
    $region3: #{tpu_custom_call.1} parent=1 // pred_check_branch
      %11 = sbr.rel (0) target = $region5
    $region4: #{tpu_custom_call.1} parent=1 // pred_region
      _
    $region5: #{tpu_custom_call.1} parent=1 // pred_fallthru
      _
    // Predicated region
    $region6: #{tpu_custom_call.1} parent=1 // pred_check
      _
    $region7: #{tpu_custom_call.1} parent=1 // pred_check_branch
      %13 = sbr.rel (0) target = $region9
    $region8: #{tpu_custom_call.1} parent=1 // pred_region
      %s15 = ssub.s32 128, 128
      %16 = vsyncadd [#allocation3], %s15
      %s18 = sshll.u32 [#allocation2], 4
      %s19 = int_to_ptr.vmem [resolvable:$true] %s18
      %21 = dma.hbm_to_vmem [thread:$0]  %s1, 128, %s19, [#allocation3]
    $region9: #{tpu_custom_call.1} parent=1 // pred_fallthru
      _
    // Predicated region
    $region10: #{tpu_custom_call.1} parent=1 // pred_check
      _
    $region11: #{tpu_custom_call.1} parent=1 // pred_check_branch
      %23 = sbr.rel (0) target = $region13
    $region12: #{tpu_custom_call.1} parent=1 // pred_region
      _
    $region13: #{tpu_custom_call.1} parent=1 // pred_fallthru
      _
    // Predicated region
    $region14: #{tpu_custom_call.1} parent=1 // pred_check
      _
    $region15: #{tpu_custom_call.1} parent=1 // pred_check_branch
      %25 = sbr.rel (0) target = $region17
    $region16: #{tpu_custom_call.1} parent=1 // pred_region
      %26 = dma.done [#allocation3], 128
    $region17: #{tpu_custom_call.1} parent=1 // pred_fallthru
      _
    %v27 = vld [vmem:[%s0] sm:$0xff]
    %v28 = vld [vmem:[#allocation2] sm:$0xff]
    %v29 = vsub.f32 %v27, %v28
    %v30 = vmul.f32 %v29, %v29
    %vm31 = vcmask 261120
    %v32 = vsel %vm31, %v30, 0.0
    %33 = vadd.xlane.f32.xlu0 %v32
    %v34 = vpop.xlane.xlu0 %33
    %v35 = vrsqrt.pop %v34
    %v36 = vmul.f32 %v34, %v35
    %vm37 = vcmp.eq.f32.partialorder %v34, inf
    %v38 = vsel %vm37, %v34, %v36
    %vm39 = vcmp.eq.f32.partialorder %v34, 0.0
    %v40 = vand.u32 %v34, 2147483648
    %v41 = vsel %vm39, %v40, %v38
    %v42 = vsub.f32 1.0, %v41
    %v43 = vmax.f32 %v42, 0.0
    %v44 = vld [vmem:[%s2] sm:$0xff]
    %v45 = vmul.f32 %v44, %v34
    %v46 = vsub.f32 1.0, %v44
    %v47 = vmul.f32 %v43, %v43
    %v48 = vmul.f32 %v46, %v47
    %v49 = vadd.f32 %v45, %v48
    %vm50 = vcmask 7168
    %v51 = vsel %vm50, %v49, 0.0
    %52 = vadd.xlane.f32.xlu0 %v51
    %v53 = vpop.xlane.xlu0 %52
    %v54 = vrot.slane %v53, 4
    %v55 = vadd.f32 %v53, %v54
    %v56 = vrot.slane %v55, 2
    %v57 = vadd.f32 %v55, %v56
    %v58 = vrot.slane %v57, 1
    %v59 = vadd.f32 %v57, %v58
    %s60 = vtos %v59
    %s61 = smul.f32 %s60, 0.0625
    %v62 = vstv %s61
    %63 = vst [vmem:[#allocation5] sm:$0xff] %v62
    // Predicated region
    $region18: #{tpu_custom_call.1} parent=1 // pred_check
      _
    $region19: #{tpu_custom_call.1} parent=1 // pred_check_branch
      %65 = sbr.rel (0) target = $region21
    $region20: #{tpu_custom_call.1} parent=1 // pred_region
      %s67 = ssub.s32 128, 128
      %68 = vsyncadd [#allocation4], %s67
      %s70 = sshll.u32 [#allocation5], 4
      %s71 = int_to_ptr.vmem [resolvable:$true] %s70
      %73 = dma.vmem_to_hbm [thread:$0]  %s71, 128, %s3, [#allocation4]
    $region21: #{tpu_custom_call.1} parent=1 // pred_fallthru
      _
    // Predicated region
    $region22: #{tpu_custom_call.1} parent=1 // pred_check
      _
    $region23: #{tpu_custom_call.1} parent=1 // pred_check_branch
      %75 = sbr.rel (0) target = $region25
    $region24: #{tpu_custom_call.1} parent=1 // pred_region
      %76 = dma.done [#allocation4], 128
    $region25: #{tpu_custom_call.1} parent=1 // pred_fallthru
      _
    %77 = vsyncpa [#allocation3], 1
    %78 = vsyncpa [#allocation4], 1

</llo_original>
